<compile_context>
chip_gen: v6e
topology: v6e:2x2x1
jax: 0.10.0
libtpu: 0.0.40
codegen_flags: <defaults>
</compile_context>

<pallas_src>
import math
import functools

import jax
import jax.numpy as jnp
from jax.experimental import pallas as pl
from jax.experimental.pallas import tpu as pltpu


# ----------------------------------------------------------------------------
# helpers
# ----------------------------------------------------------------------------

def _round_up(n, m):
    return ((n + m - 1) // m) * m


@functools.lru_cache(maxsize=1)
def _vmem_capacity_bytes():
    """Physical VMEM per TensorCore (64 MiB v7x, 128 MiB v5e/v6e)."""
    try:
        info = pltpu.get_tpu_info()
        cap = getattr(info, "vmem_capacity_bytes", None)
        if cap:
            return int(cap)
    except Exception:
        pass
    return 128 << 20


def _feature_check_kernel(x_ref, o_ref):
    o_ref[...] = x_ref[...]


@functools.lru_cache(maxsize=1)
def _buffered_specs_supported():
    """One-time cached check that pl.Buffered(1) specs compile on this build."""
    try:
        fn = pl.pallas_call(
            _feature_check_kernel,
            out_shape=jax.ShapeDtypeStruct((8, 128), jnp.float32),
            grid=(1,),
            in_specs=[pl.BlockSpec((8, 128), lambda i: (0, 0),
                                   pipeline_mode=pl.Buffered(1))],
            out_specs=pl.BlockSpec((8, 128), lambda i: (0, 0)),
        )
        jax.block_until_ready(fn(jnp.zeros((8, 128), jnp.float32)))
        return True
    except Exception:
        return False


def _choose_tile_m(n_rows, target):
    """Row tile: big (amortize per-step overhead), multiple of 8, limited
    padding waste, and >= 2 grid steps when possible (v7x megacore)."""
    n8 = _round_up(max(n_rows, 1), 8)
    tm = max(8, min(_round_up(target, 8), n8))
    # Shrink if row padding waste would exceed ~12.5% of the real rows.
    while tm > 8:
        waste = _round_up(n_rows, tm) - n_rows
        if waste * 8 <= n_rows:
            break
        tm = max(8, _round_up(tm // 2, 8))
    # Keep >= 2 steps along the "parallel" axis so both v7x TCs get work.
    if _round_up(n_rows, tm) // tm < 2 and n8 >= 16:
        tm = max(8, _round_up(n8 // 2, 8))
    return tm


def _choose_tile_n(hidden):
    for tn in (512, 256, 128):
        if hidden % tn == 0:
            return tn
    return hidden


# ----------------------------------------------------------------------------
# kernels
# ----------------------------------------------------------------------------

def _ln_gelu(h, vec_ref, eps):
    """One-pass LayerNorm + exact erf gelu, f32 math. vec rows: b1,gamma,beta."""
    h = h + vec_ref[0:1, :].astype(jnp.float32)
    mean = jnp.mean(h, axis=-1, keepdims=True)
    mean_sq = jnp.mean(h * h, axis=-1, keepdims=True)
    var = jnp.maximum(mean_sq - mean * mean, 0.0)
    scale = vec_ref[1:2, :].astype(jnp.float32) * jax.lax.rsqrt(var + eps)
    h = h * scale + (vec_ref[2:3, :].astype(jnp.float32) - mean * scale)
    return 0.5 * h * (1.0 + jax.lax.erf(h * (1.0 / math.sqrt(2.0))))


def _mlm_head_row_kernel(x_ref, w1_ref, vec_ref, w2_ref, b2_ref, o_ref, *, eps):
    """Both H x H weights resident; grid over row tiles only."""
    x = x_ref[...]
    if x.dtype != w1_ref.dtype:
        x = x.astype(w1_ref.dtype)            # feed MXU native (bf16) operands
    h = jnp.dot(x, w1_ref[...], preferred_element_type=jnp.float32)
    h = _ln_gelu(h, vec_ref, eps)
    y = jnp.dot(h.astype(w2_ref.dtype), w2_ref[...],
                preferred_element_type=jnp.float32)
    y = y + b2_ref[...].astype(jnp.float32)
    o_ref[...] = y.astype(o_ref.dtype)


def _mlm_head_col_kernel(x_ref, w1_ref, vec_ref, w2_ref, b2_ref, o_ref, h_ref,
                         *, eps):
    """Large-H path: W1 resident, W2 streamed in (H, tn) column blocks.
    h is computed once per row tile (j == 0) into a VMEM scratch."""
    @pl.when(pl.program_id(1) == 0)
    def _():
        x = x_ref[...]
        if x.dtype != w1_ref.dtype:
            x = x.astype(w1_ref.dtype)
        h = jnp.dot(x, w1_ref[...], preferred_element_type=jnp.float32)
        h = _ln_gelu(h, vec_ref, eps)
        h_ref[...] = h.astype(h_ref.dtype)

    y = jnp.dot(h_ref[...], w2_ref[...], preferred_element_type=jnp.float32)
    y = y + b2_ref[...].astype(jnp.float32)
    o_ref[...] = y.astype(o_ref.dtype)


# ----------------------------------------------------------------------------
# pallas_call builders
# ----------------------------------------------------------------------------

def _resident_spec(shape, index_map, buffered_ok):
    if buffered_ok:
        return pl.BlockSpec(shape, index_map, pipeline_mode=pl.Buffered(1))
    return pl.BlockSpec(shape, index_map)


def _build_row_call(n_rows, hidden, tm, out_dtype, eps, vmem_limit, cost,
                    buffered_ok):
    kernel = functools.partial(_mlm_head_row_kernel, eps=eps)
    const = lambda i: (0, 0)
    return pl.pallas_call(
        kernel,
        out_shape=jax.ShapeDtypeStruct((n_rows, hidden), out_dtype),
        grid_spec=pltpu.PrefetchScalarGridSpec(
            num_scalar_prefetch=0,
            grid=(n_rows // tm,),
            in_specs=[
                pl.BlockSpec((tm, hidden), lambda i: (i, 0)),      # x rows
                _resident_spec((hidden, hidden), const, buffered_ok),  # W1^T
                _resident_spec((3, hidden), const, buffered_ok),       # b1,g,b
                _resident_spec((hidden, hidden), const, buffered_ok),  # W2^T
                _resident_spec((1, hidden), const, buffered_ok),       # b2
            ],
            out_specs=pl.BlockSpec((tm, hidden), lambda i: (i, 0)),
        ),
        compiler_params=pltpu.CompilerParams(
            dimension_semantics=("parallel",),
            vmem_limit_bytes=vmem_limit),
        cost_estimate=cost,
    )


def _build_col_call(n_rows, hidden, tm, tn, out_dtype, h_dtype, eps,
                    vmem_limit, cost, buffered_ok):
    kernel = functools.partial(_mlm_head_col_kernel, eps=eps)
    const = lambda i, j: (0, 0)
    return pl.pallas_call(
        kernel,
        out_shape=jax.ShapeDtypeStruct((n_rows, hidden), out_dtype),
        grid_spec=pltpu.PrefetchScalarGridSpec(
            num_scalar_prefetch=0,
            grid=(n_rows // tm, hidden // tn),
            in_specs=[
                pl.BlockSpec((tm, hidden), lambda i, j: (i, 0)),   # x rows
                _resident_spec((hidden, hidden), const, buffered_ok),  # W1^T
                _resident_spec((3, hidden), const, buffered_ok),       # b1,g,b
                pl.BlockSpec((hidden, tn), lambda i, j: (0, j)),   # W2^T cols
                pl.BlockSpec((1, tn), lambda i, j: (0, j)),        # b2 cols
            ],
            out_specs=pl.BlockSpec((tm, tn), lambda i, j: (i, j)),
            scratch_shapes=[pltpu.VMEM((tm, hidden), h_dtype)],
        ),
        compiler_params=pltpu.CompilerParams(
            dimension_semantics=("parallel", "arbitrary"),
            vmem_limit_bytes=vmem_limit),
        cost_estimate=cost,
    )


# ----------------------------------------------------------------------------
# wrapper
# ----------------------------------------------------------------------------

def prototype_contrastive_mlm_head(x, params, *, eps=1e-12, tile_m=512,
                                   force_column_tiled=False):
    """x: (B, S, H) or (N, H). params: kernel-ready dict from init_params."""
    orig_shape = x.shape
    H = orig_shape[-1]
    x2d = x.reshape(-1, H)
    N = x2d.shape[0]

    w1_t = params["w1_t"]     # (in, out), pre-transposed once at init
    w2_t = params["w2_t"]
    vec = params["vec"]       # (3, H): rows b1, gamma, beta
    b2 = params["b2"]         # (1, H): module's attached zero bias

    x_isz = jnp.dtype(x.dtype).itemsize
    w_isz = jnp.dtype(w1_t.dtype).itemsize

    cap = _vmem_capacity_bytes()
    budget = int(0.9 * cap)
    buffered_ok = _buffered_specs_supported()
    w_buf = 1 if buffered_ok else 2

    tm = _choose_tile_m(N, tile_m)
    n_pad = _round_up(N, tm)
    if n_pad != N:
        x2d = jnp.pad(x2d, ((0, n_pad - N), (0, 0)))

    cost = pl.CostEstimate(
        flops=4 * n_pad * H * H,                 # two N x H x H matmuls
        transcendentals=n_pad * H,               # erf
        bytes_accessed=2 * n_pad * H * x_isz + (2 * H * H + 4 * H) * w_isz)

    resident_w = (2 * H * H + 4 * H) * w_isz * w_buf
    use_columns = force_column_tiled or resident_w > int(0.4 * cap)

    if not use_columns:
        needed = (resident_w
                  + 4 * tm * H * x_isz          # dbl-buffered x / out tiles
                  + 4 * tm * H * 4)             # f32 intermediates slack
        vmem_limit = int(min(max(int(1.5 * needed), 32 << 20), budget))
        call = _build_row_call(n_pad, H, tm, x.dtype, eps, vmem_limit, cost,
                               buffered_ok)
        out2d = call(x2d, w1_t, vec, w2_t, b2)
    else:
        tn = _choose_tile_n(H)
        h_dtype = w2_t.dtype if jnp.dtype(w2_t.dtype).itemsize < 4 else jnp.float32
        needed = ((H * H + 3 * H) * w_isz * w_buf          # resident W1 + vec
                  + 2 * (H * tn + tn) * w_isz              # streamed W2 + b2
                  + 2 * tm * H * x_isz + 2 * tm * tn * x_isz
                  + tm * H * jnp.dtype(h_dtype).itemsize   # h scratch
                  + 4 * tm * H * 4)                        # f32 slack
        vmem_limit = int(min(max(int(1.5 * needed), 32 << 20), budget))
        call = _build_col_call(n_pad, H, tm, tn, x.dtype, h_dtype, eps,
                               vmem_limit, cost, buffered_ok)
        out2d = call(x2d, w1_t, vec, w2_t, b2)

    if n_pad != N:
        out2d = out2d[:N]
    return out2d.reshape(orig_shape)


def init_params(key, hidden_size, dtype=jnp.float32):
    """Kernel-ready params. Use dtype=jnp.bfloat16 to feed the MXU bf16
    operands (recommended); accumulation / LN / gelu stay f32 in-kernel."""
    k1, k2, k3 = jax.random.split(key, 3)
    std = 0.02
    w1 = jax.random.normal(k1, (hidden_size, hidden_size), jnp.float32) * std
    w2 = jax.random.normal(k3, (hidden_size, hidden_size), jnp.float32) * std
    b1 = jax.random.normal(k2, (hidden_size,), jnp.float32) * std
    gamma = jnp.ones((hidden_size,), jnp.float32)
    beta = jnp.zeros((hidden_size,), jnp.float32)
    return {
        "w1_t": jnp.asarray(w1.T, dtype),                   # (in, out)
        "w2_t": jnp.asarray(w2.T, dtype),                   # (in, out)
        "vec": jnp.stack([b1, gamma, beta]).astype(dtype),  # (3, H)
        "b2": jnp.zeros((1, hidden_size), dtype),           # attached zero bias
    }


def _reference(x, params, eps=1e-12):
    """Pure-JAX reference mirroring the kernel's dtype handling."""
    w1, w2 = params["w1_t"], params["w2_t"]
    vec = params["vec"].astype(jnp.float32)
    b1, gamma, beta = vec[0], vec[1], vec[2]
    b2 = params["b2"].reshape(-1).astype(jnp.float32)
    x2d = x.reshape(-1, x.shape[-1]).astype(w1.dtype)
    h = jnp.dot(x2d, w1, preferred_element_type=jnp.float32) + b1
    mean = jnp.mean(h, axis=-1, keepdims=True)
    var = jnp.mean((h - mean) ** 2, axis=-1, keepdims=True)
    h = (h - mean) * jax.lax.rsqrt(var + eps)
    h = h * gamma + beta
    h = 0.5 * h * (1.0 + jax.lax.erf(h / jnp.sqrt(2.0)))
    y = jnp.dot(h.astype(w2.dtype), w2, preferred_element_type=jnp.float32) + b2
    return y.reshape(x.shape).astype(x.dtype)


if __name__ == "__main__":
    key = jax.random.PRNGKey(0)
    k_in, k_param = jax.random.split(key)

    batch, seq, hidden = 2, 8, 32
    eps = 1e-12

    x = jax.random.normal(k_in, (batch, seq, hidden), jnp.float32)

    # 1) f32 params, resident-weights row path (tight tolerance).
    params_f32 = init_params(k_param, hidden, dtype=jnp.float32)
    out = jax.block_until_ready(
        prototype_contrastive_mlm_head(x, params_f32, eps=eps))
    ref = _reference(x, params_f32, eps=eps)
    assert out.shape == (batch, seq, hidden)
    assert jnp.allclose(out, ref, atol=1e-4, rtol=1e-4), (
        float(jnp.max(jnp.abs(out - ref))))

    # 2) Column-tiled (W2-streaming, large-H) path, exercised explicitly.
    out_col = jax.block_until_ready(
        prototype_contrastive_mlm_head(x, params_f32, eps=eps,
                                       force_column_tiled=True))
    assert jnp.allclose(out_col, ref, atol=1e-4, rtol=1e-4), (
        float(jnp.max(jnp.abs(out_col - ref))))

    # 3) bf16 weights feeding the MXU (looser tolerance).
    params_bf16 = init_params(k_param, hidden, dtype=jnp.bfloat16)
    out_bf = jax.block_until_ready(
        prototype_contrastive_mlm_head(x, params_bf16, eps=eps))
    ref_bf = _reference(x, params_bf16, eps=eps)
    assert jnp.allclose(out_bf, ref_bf, atol=3e-2, rtol=3e-2), (
        float(jnp.max(jnp.abs(out_bf - ref_bf))))

    print("KERNEL_OK")
</pallas_src>

<mosaic_0001>
module attributes {stable_mosaic.version = 11 : i64} {
  func.func @_feature_check_kernel(%arg0: i32, %arg1: memref<8x128xf32, #tpu.memory_space<vmem>>, %arg2: memref<8x128xf32, #tpu.memory_space<vmem>>) attributes {dimension_semantics = [#tpu.dimension_semantics<arbitrary>], iteration_bounds = array<i64: 1>, scalar_prefetch = 0 : i64, scratch_operands = 0 : i64, tpu.core_type = #tpu.core_type<tc>, window_params = [{pipeline_mode = #tpu.pipeline_mode<synchronous>, transform_indices = @transform_0, window_bounds = array<i64: 8, 128>}, {pipeline_mode = #tpu.pipeline_mode<synchronous>, transform_indices = @transform_1, window_bounds = array<i64: 8, 128>}]} {
    %c0 = arith.constant 0 : index
    %c0_0 = arith.constant 0 : index
    %0 = vector.load %arg1[%c0, %c0_0] : memref<8x128xf32, #tpu.memory_space<vmem>>, vector<8x128xf32>
    %c0_1 = arith.constant 0 : index
    %c0_2 = arith.constant 0 : index
    %1 = vector.load %arg2[%c0_1, %c0_2] : memref<8x128xf32, #tpu.memory_space<vmem>>, vector<8x128xf32>
    tpu.vector_store %arg2[%c0_1, %c0_2], %0 {strides = array<i32>} : memref<8x128xf32, #tpu.memory_space<vmem>>, vector<8x128xf32>,
    return
  }
  func.func @transform_0(%arg0: i32) -> (i32, i32) {
    %c0_i32 = arith.constant 0 : i32
    %c0_i32_0 = arith.constant 0 : i32
    %c0_i32_1 = arith.constant 0 : i32
    return %c0_i32, %c0_i32_0 : i32, i32
  }
  func.func @transform_1(%arg0: i32) -> (i32, i32) {
    %c0_i32 = arith.constant 0 : i32
    %c0_i32_0 = arith.constant 0 : i32
    %c0_i32_1 = arith.constant 0 : i32
    return %c0_i32, %c0_i32_0 : i32, i32
  }
}

module attributes {stable_mosaic.version = 11 : i64} {
  func.func @_mlm_head_row_kernel(%arg0: i32, %arg1: memref<8x32xf32, #tpu.memory_space<vmem>>, %arg2: memref<32x32xf32, #tpu.memory_space<vmem>>, %arg3: memref<3x32xf32, #tpu.memory_space<vmem>>, %arg4: memref<32x32xf32, #tpu.memory_space<vmem>>, %arg5: memref<1x32xf32, #tpu.memory_space<vmem>>, %arg6: memref<8x32xf32, #tpu.memory_space<vmem>>) attributes {dimension_semantics = [#tpu.dimension_semantics<parallel>], iteration_bounds = array<i64: 2>, scalar_prefetch = 0 : i64, scratch_operands = 0 : i64, tpu.core_type = #tpu.core_type<tc>, window_params = [{transform_indices = @transform_0, window_bounds = array<i64: 8, 32>}, {pipeline_mode = #tpu.pipeline_mode<synchronous>, transform_indices = @transform_1, window_bounds = array<i64: 32, 32>}, {pipeline_mode = #tpu.pipeline_mode<synchronous>, transform_indices = @transform_2, window_bounds = array<i64: 3, 32>}, {pipeline_mode = #tpu.pipeline_mode<synchronous>, transform_indices = @transform_3, window_bounds = array<i64: 32, 32>}, {pipeline_mode = #tpu.pipeline_mode<synchronous>, transform_indices = @transform_4, window_bounds = array<i64: 1, 32>}, {transform_indices = @transform_5, window_bounds = array<i64: 8, 32>}]} {
    %c0 = arith.constant 0 : index
    %c0_0 = arith.constant 0 : index
    %0 = vector.load %arg1[%c0, %c0_0] : memref<8x32xf32, #tpu.memory_space<vmem>>, vector<8x32xf32>
    %c0_1 = arith.constant 0 : index
    %c0_2 = arith.constant 0 : index
    %1 = vector.load %arg2[%c0_1, %c0_2] : memref<32x32xf32, #tpu.memory_space<vmem>>, vector<32x32xf32>
    %cst = arith.constant dense<0.000000e+00> : vector<8x32xf32>
    %2 = tpu.matmul %0, %1, %cst {dimension_numbers = #tpu.dot_dimension_numbers<[1], [0], [0], [1], [0, 0, 1, 1], [], []>} : vector<8x32xf32>, vector<32x32xf32>, vector<8x32xf32> -> vector<8x32xf32>
    %c0_3 = arith.constant 0 : index
    %c0_4 = arith.constant 0 : index
    %3 = vector.load %arg3[%c0_3, %c0_4] : memref<3x32xf32, #tpu.memory_space<vmem>>, vector<1x32xf32>
    %4 = vector.broadcast %3 : vector<1x32xf32> to vector<8x32xf32>
    %5 = arith.addf %2, %4 : vector<8x32xf32>
    %cst_5 = arith.constant dense<0.000000e+00> : vector<8xf32>
    %6 = vector.multi_reduction <add>, %5, %cst_5 [1] : vector<8x32xf32> to vector<8xf32>
    %7 = vector.shape_cast %6 : vector<8xf32> to vector<8x1xf32>
    %cst_6 = arith.constant 3.200000e+01 : f32
    %8 = vector.broadcast %cst_6 : f32 to vector<8x1xf32>
    %9 = arith.divf %7, %8 : vector<8x1xf32>
    %10 = arith.mulf %5, %5 : vector<8x32xf32>
    %cst_7 = arith.constant dense<0.000000e+00> : vector<8xf32>
    %11 = vector.multi_reduction <add>, %10, %cst_7 [1] : vector<8x32xf32> to vector<8xf32>
    %12 = vector.shape_cast %11 : vector<8xf32> to vector<8x1xf32>
    %cst_8 = arith.constant 3.200000e+01 : f32
    %13 = vector.broadcast %cst_8 : f32 to vector<8x1xf32>
    %14 = arith.divf %12, %13 : vector<8x1xf32>
    %15 = arith.mulf %9, %9 : vector<8x1xf32>
    %16 = arith.subf %14, %15 : vector<8x1xf32>
    %cst_9 = arith.constant 0.000000e+00 : f32
    %17 = vector.broadcast %cst_9 : f32 to vector<8x1xf32>
    %18 = arith.maximumf %16, %17 : vector<8x1xf32>
    %c1 = arith.constant 1 : index
    %c0_10 = arith.constant 0 : index
    %19 = vector.load %arg3[%c1, %c0_10] : memref<3x32xf32, #tpu.memory_space<vmem>>, vector<1x32xf32>
    %cst_11 = arith.constant 9.99999996E-13 : f32
    %20 = vector.broadcast %cst_11 : f32 to vector<8x1xf32>
    %21 = arith.addf %18, %20 : vector<8x1xf32>
    %22 = math.rsqrt %21 : vector<8x1xf32>
    %23 = vector.broadcast %19 : vector<1x32xf32> to vector<8x32xf32>
    %24 = vector.broadcast %22 : vector<8x1xf32> to vector<8x32xf32>
    %25 = arith.mulf %23, %24 : vector<8x32xf32>
    %26 = arith.mulf %5, %25 : vector<8x32xf32>
    %c2 = arith.constant 2 : index
    %c0_12 = arith.constant 0 : index
    %27 = vector.load %arg3[%c2, %c0_12] : memref<3x32xf32, #tpu.memory_space<vmem>>, vector<1x32xf32>
    %28 = vector.broadcast %9 : vector<8x1xf32> to vector<8x32xf32>
    %29 = arith.mulf %28, %25 : vector<8x32xf32>
    %30 = vector.broadcast %27 : vector<1x32xf32> to vector<8x32xf32>
    %31 = arith.subf %30, %29 : vector<8x32xf32>
    %32 = arith.addf %26, %31 : vector<8x32xf32>
    %cst_13 = arith.constant 5.000000e-01 : f32
    %33 = vector.broadcast %cst_13 : f32 to vector<8x32xf32>
    %34 = arith.mulf %33, %32 : vector<8x32xf32>
    %cst_14 = arith.constant 0.707106769 : f32
    %35 = vector.broadcast %cst_14 : f32 to vector<8x32xf32>
    %36 = arith.mulf %32, %35 : vector<8x32xf32>
    %37 = math.erf %36 : vector<8x32xf32>
    %cst_15 = arith.constant 1.000000e+00 : f32
    %38 = vector.broadcast %cst_15 : f32 to vector<8x32xf32>
    %39 = arith.addf %38, %37 : vector<8x32xf32>
    %40 = arith.mulf %34, %39 : vector<8x32xf32>
    %c0_16 = arith.constant 0 : index
    %c0_17 = arith.constant 0 : index
    %41 = vector.load %arg4[%c0_16, %c0_17] : memref<32x32xf32, #tpu.memory_space<vmem>>, vector<32x32xf32>
    %cst_18 = arith.constant dense<0.000000e+00> : vector<8x32xf32>
    %42 = tpu.matmul %40, %41, %cst_18 {dimension_numbers = #tpu.dot_dimension_numbers<[1], [0], [0], [1], [0, 0, 1, 1], [], []>} : vector<8x32xf32>, vector<32x32xf32>, vector<8x32xf32> -> vector<8x32xf32>
    %c0_19 = arith.constant 0 : index
    %c0_20 = arith.constant 0 : index
    %43 = vector.load %arg5[%c0_19, %c0_20] : memref<1x32xf32, #tpu.memory_space<vmem>>, vector<1x32xf32>
    %44 = vector.broadcast %43 : vector<1x32xf32> to vector<8x32xf32>
    %45 = arith.addf %42, %44 : vector<8x32xf32>
    %c0_21 = arith.constant 0 : index
    %c0_22 = arith.constant 0 : index
    %46 = vector.load %arg6[%c0_21, %c0_22] : memref<8x32xf32, #tpu.memory_space<vmem>>, vector<8x32xf32>
    tpu.vector_store %arg6[%c0_21, %c0_22], %45 {strides = array<i32>} : memref<8x32xf32, #tpu.memory_space<vmem>>, vector<8x32xf32>,
    return
  }
  func.func @transform_0(%arg0: i32) -> (i32, i32) {
    %c0_i32 = arith.constant 0 : i32
    %c0_i32_0 = arith.constant 0 : i32
    return %arg0, %c0_i32 : i32, i32
  }
  func.func @transform_1(%arg0: i32) -> (i32, i32) {
    %c0_i32 = arith.constant 0 : i32
    %c0_i32_0 = arith.constant 0 : i32
    %c0_i32_1 = arith.constant 0 : i32
    return %c0_i32, %c0_i32_0 : i32, i32
  }
  func.func @transform_2(%arg0: i32) -> (i32, i32) {
    %c0_i32 = arith.constant 0 : i32
    %c0_i32_0 = arith.constant 0 : i32
    %c0_i32_1 = arith.constant 0 : i32
    return %c0_i32, %c0_i32_0 : i32, i32
  }
  func.func @transform_3(%arg0: i32) -> (i32, i32) {
    %c0_i32 = arith.constant 0 : i32
    %c0_i32_0 = arith.constant 0 : i32
    %c0_i32_1 = arith.constant 0 : i32
    return %c0_i32, %c0_i32_0 : i32, i32
  }
  func.func @transform_4(%arg0: i32) -> (i32, i32) {
    %c0_i32 = arith.constant 0 : i32
    %c0_i32_0 = arith.constant 0 : i32
    %c0_i32_1 = arith.constant 0 : i32
    return %c0_i32, %c0_i32_0 : i32, i32
  }
  func.func @transform_5(%arg0: i32) -> (i32, i32) {
    %c0_i32 = arith.constant 0 : i32
    %c0_i32_0 = arith.constant 0 : i32
    return %arg0, %c0_i32 : i32, i32
  }
}

</mosaic_0001>

<llo_original>
// kernel: tpu_custom_call.1
$region0: #{tpu_custom_call.1}
  #allocation0 [shape = 'u32[]', space=smem, size = 0x4, offset = 0x4, fixed_abs, tag = 'smem constant byte address 0x4 - core index']
  #allocation1 [shape = 'u32[144,128]{1,0:T(1,128)}', space=vmem, size = 0x12000, scoped, tag = 'internal scratch']
  %s0 = inlined_call_operand.hbm [shape: f32[8,128], index: 0, kind: input, shape index: {}]
  %s1 = inlined_call_operand.hbm [shape: f32[8,128], index: 1, kind: output, shape index: {}]
  %s2 = sld [smem:[#allocation0]]
  $region18: #{tpu_custom_call.1} parent=0
    _
  %s4 = ssub.s32 1, %s2
  %s5 = scalar_select 0, %s4, %s2
  $region1: #{tpu_custom_call.1} parent=0
    #allocation2 [shape = 'u8[4096]{0}', space=vmem, size = 0x1000, scoped, tag = 'input window, operand 0, single buffered']
    #allocation3 [shape = 's32[1]{0}', space=sflag, size = 0x4, scoped, tag = 'scoped memory for tpu_custom_call.1']
    #allocation4 [shape = 's32[1]{0}', space=sflag, size = 0x4, scoped, tag = 'scoped memory for tpu_custom_call.1']
    #allocation5 [shape = 'u8[4096]{0}', space=vmem, size = 0x1000, scoped, tag = 'output window, operand 0, single buffered']
    %6 = vsyncpa [#allocation3], 0
    %7 = vsyncpa [#allocation4], 0
    // Predicated region
    $region2: #{tpu_custom_call.1} parent=1 // pred_check
      _
    $region3: #{tpu_custom_call.1} parent=1 // pred_check_branch
      %9 = sbr.rel (0) target = $region5
    $region4: #{tpu_custom_call.1} parent=1 // pred_region
      %s11 = ssub.s32 128, 128
      %12 = vsyncadd [#allocation3], %s11
      %s14 = sshll.u32 [#allocation2], 4
      %s15 = int_to_ptr.vmem [resolvable:$true] %s14
      %17 = dma.hbm_to_vmem [thread:$0]  %s0, 128, %s15, [#allocation3]
    $region5: #{tpu_custom_call.1} parent=1 // pred_fallthru
      _
    // Predicated region
    $region6: #{tpu_custom_call.1} parent=1 // pred_check
      _
    $region7: #{tpu_custom_call.1} parent=1 // pred_check_branch
      %19 = sbr.rel (0) target = $region9
    $region8: #{tpu_custom_call.1} parent=1 // pred_region
      %20 = dma.done [#allocation3], 128
    $region9: #{tpu_custom_call.1} parent=1 // pred_fallthru
      _
    %v21 = vld [vmem:[#allocation2] sm:$0xff]
    %22 = vst [vmem:[#allocation5] sm:$0xff] %v21
    // Predicated region
    $region10: #{tpu_custom_call.1} parent=1 // pred_check
      _
    $region11: #{tpu_custom_call.1} parent=1 // pred_check_branch
      %24 = sbr.rel (0) target = $region13
    $region12: #{tpu_custom_call.1} parent=1 // pred_region
      %s26 = ssub.s32 128, 128
      %27 = vsyncadd [#allocation4], %s26
      %s29 = sshll.u32 [#allocation5], 4
      %s30 = int_to_ptr.vmem [resolvable:$true] %s29
      %32 = dma.vmem_to_hbm [thread:$0]  %s30, 128, %s1, [#allocation4]
    $region13: #{tpu_custom_call.1} parent=1 // pred_fallthru
      _
    // Predicated region
    $region14: #{tpu_custom_call.1} parent=1 // pred_check
      _
    $region15: #{tpu_custom_call.1} parent=1 // pred_check_branch
      %34 = sbr.rel (0) target = $region17
    $region16: #{tpu_custom_call.1} parent=1 // pred_region
      %35 = dma.done [#allocation4], 128
    $region17: #{tpu_custom_call.1} parent=1 // pred_fallthru
      _
    %36 = vsyncpa [#allocation3], 1
    %37 = vsyncpa [#allocation4], 1

// kernel: tpu_custom_call.1
$region0: #{tpu_custom_call.1}
  #allocation0 [shape = 'u32[]', space=smem, size = 0x4, offset = 0x4, fixed_abs, tag = 'smem constant byte address 0x4 - core index']
  #allocation1 [shape = 'u32[144,128]{1,0:T(1,128)}', space=vmem, size = 0x12000, scoped, tag = 'internal scratch']
  %s0 = inlined_call_operand.hbm [shape: f32[16,32], index: 0, kind: input, shape index: {}]
  %s1 = inlined_call_operand.hbm [shape: f32[32,32], index: 1, kind: input, shape index: {}]
  %s2 = inlined_call_operand.hbm [shape: f32[3,32], index: 2, kind: input, shape index: {}]
  %s3 = inlined_call_operand.hbm [shape: f32[32,32], index: 3, kind: input, shape index: {}]
  %s4 = inlined_call_operand.vmem [shape: f32[1,32], index: 4, kind: input, shape index: {}]
  %s5 = inlined_call_operand.hbm [shape: f32[16,32], index: 5, kind: output, shape index: {}]
  %s6 = sld [smem:[#allocation0]]
  $region69: #{tpu_custom_call.1} parent=0
    _
  %s8 = ssub.s32 1, %s6
  %s9 = scalar_select 0, %s8, %s6
  $region1: #{tpu_custom_call.1} parent=0
    #allocation2 [shape = 'u8[8192]{0}', space=vmem, size = 0x2000, scoped, tag = 'input window, operand 0']
    #allocation3 [shape = 's32[2]{0}', space=sflag, size = 0x8, scoped, tag = 'scoped memory for tpu_custom_call.1']
    #allocation4 [shape = 's32[2]{0}', space=sflag, size = 0x8, scoped, tag = 'scoped memory for tpu_custom_call.1']
    #allocation5 [shape = 'u8[16384]{0}', space=vmem, size = 0x4000, scoped, tag = 'input window, operand 1, single buffered']
    #allocation6 [shape = 's32[1]{0}', space=sflag, size = 0x4, scoped, tag = 'scoped memory for tpu_custom_call.1']
    #allocation7 [shape = 'u8[2048]{0}', space=vmem, size = 0x800, scoped, tag = 'input window, operand 2, single buffered']
    #allocation8 [shape = 'u8[16384]{0}', space=vmem, size = 0x4000, scoped, tag = 'input window, operand 3, single buffered']
    #allocation9 [shape = 's32[1]{0}', space=sflag, size = 0x4, scoped, tag = 'scoped memory for tpu_custom_call.1']
    #allocation10 [shape = 'u8[8192]{0}', space=vmem, size = 0x2000, scoped, tag = 'output window, operand 0']
    %10 = vsyncpa [#allocation3], 0
    %s11 = scalar_lea.sflag [#allocation3], 1
    %12 = vsyncpa %s11, 0
    %13 = vsyncpa [#allocation6], 0
    %14 = vsyncpa [#allocation9], 0
    %15 = vsyncpa [#allocation4], 0
    %s16 = scalar_lea.sflag [#allocation4], 1
    %17 = vsyncpa %s16, 0
    loop: start=0, step=1, limit=4
    $region2: #{tpu_custom_call.1} parent=1 // loop_pre_header
      _
    $region3: #{tpu_custom_call.1} parent=1 // loop_header
      %s19 = sphi 0, %s23
      %p20 = scmp.ge.s32.totalorder %s19, 4
      %s29 = sphi 0, %s31
      %s32 = sphi 0, %s29
      %s33 = sphi 0, %s32
      %s49 = sphi 0, %s33
      %s53 = sphi 0, %s53
      %s55 = sphi 0, %s53
      %s56 = sphi 0, %s55
      %s70 = sphi 0, %s56
      %s74 = sphi 0, %s74
      %s76 = sphi 0, %s74
      %s77 = sphi 0, %s76
      %s91 = sphi 0, %s77
      %s95 = sphi 0, %s95
      %s97 = sphi 0, %s95
      %s98 = sphi 0, %s97
      %s112 = sphi 0, %s98
      %s116 = sphi 0, %s116
      %s118 = sphi 0, %s116
      %s119 = sphi 0, %s118
      %s133 = sphi 0, %s119
      %s139 = sphi 0, %s141
      %s142 = sphi 0, %s139
      %s143 = sphi 0, %s142
      %s159 = sphi 0, %s143
    $region4: #{tpu_custom_call.1} parent=1 // loop_header_branch
      %22 = sbr.rel (%p20) target = $region8
    $region5: #{tpu_custom_call.1} parent=1 // loop_body
      %s24 = ssub.s32 %s19, 1
      %s25 = ssub.s32 %s19, 2
      %s26 = sadd.s32 %s19, 1
      %s27 = ssub.s32 %s19, %s26
      %p28 = scmp.eq.s32.totalorder %s27, 0
      %s30 = sadd.s32 %s29, 1
      %s31 = scalar_select %p28, %s29, %s30
      %p34 = pneg %p28
      %p35 = scmp.eq.s32.totalorder %s19, 1
      %p36 = por %p34, %p35
      %p37 = scmp.ne.s32.totalorder %s29, %s32
      %p38 = scmp.eq.s32.totalorder %s19, 0
      %p39 = por %p37, %p38
      %p40 = scmp.ne.s32.totalorder %s29, %s32
      %p41 = scmp.eq.s32.totalorder %s24, 1
      %p42 = por %p40, %p41
      %p43 = scmp.ne.s32.totalorder %s32, %s33
      %p44 = scmp.eq.s32.totalorder %s24, 0
      %p45 = por %p43, %p44
      %p46 = scmp.ne.s32.totalorder %s32, %s33
      %p47 = scmp.eq.s32.totalorder %s25, 1
      %p48 = por %p46, %p47
      %p50 = scmp.ne.s32.totalorder %s33, %s49
      %p51 = scmp.eq.s32.totalorder %s25, 0
      %p52 = por %p50, %p51
      %s54 = sadd.s32 %s53, 1
      %p57 = scmp.eq.s32.totalorder %s19, 1
      %p58 = scmp.ne.s32.totalorder %s53, %s55
      %p59 = scmp.eq.s32.totalorder %s19, 0
      %p60 = por %p58, %p59
      %p61 = scmp.ne.s32.totalorder %s53, %s55
      %p62 = scmp.eq.s32.totalorder %s24, 1
      %p63 = por %p61, %p62
      %p64 = scmp.ne.s32.totalorder %s55, %s56
      %p65 = scmp.eq.s32.totalorder %s24, 0
      %p66 = por %p64, %p65
      %p67 = scmp.ne.s32.totalorder %s55, %s56
      %p68 = scmp.eq.s32.totalorder %s25, 1
      %p69 = por %p67, %p68
      %p71 = scmp.ne.s32.totalorder %s56, %s70
      %p72 = scmp.eq.s32.totalorder %s25, 0
      %p73 = por %p71, %p72
      %s75 = sadd.s32 %s74, 1
      %p78 = scmp.eq.s32.totalorder %s19, 1
      %p79 = scmp.ne.s32.totalorder %s74, %s76
      %p80 = scmp.eq.s32.totalorder %s19, 0
      %p81 = por %p79, %p80
      %p82 = scmp.ne.s32.totalorder %s74, %s76
      %p83 = scmp.eq.s32.totalorder %s24, 1
      %p84 = por %p82, %p83
      %p85 = scmp.ne.s32.totalorder %s76, %s77
      %p86 = scmp.eq.s32.totalorder %s24, 0
      %p87 = por %p85, %p86
      %p88 = scmp.ne.s32.totalorder %s76, %s77
      %p89 = scmp.eq.s32.totalorder %s25, 1
      %p90 = por %p88, %p89
      %p92 = scmp.ne.s32.totalorder %s77, %s91
      %p93 = scmp.eq.s32.totalorder %s25, 0
      %p94 = por %p92, %p93
      %s96 = sadd.s32 %s95, 1
      %p99 = scmp.eq.s32.totalorder %s19, 1
      %p100 = scmp.ne.s32.totalorder %s95, %s97
      %p101 = scmp.eq.s32.totalorder %s19, 0
      %p102 = por %p100, %p101
      %p103 = scmp.ne.s32.totalorder %s95, %s97
      %p104 = scmp.eq.s32.totalorder %s24, 1
      %p105 = por %p103, %p104
      %p106 = scmp.ne.s32.totalorder %s97, %s98
      %p107 = scmp.eq.s32.totalorder %s24, 0
      %p108 = por %p106, %p107
      %p109 = scmp.ne.s32.totalorder %s97, %s98
      %p110 = scmp.eq.s32.totalorder %s25, 1
      %p111 = por %p109, %p110
      %p113 = scmp.ne.s32.totalorder %s98, %s112
      %p114 = scmp.eq.s32.totalorder %s25, 0
      %p115 = por %p113, %p114
      %s117 = sadd.s32 %s116, 1
      %p120 = scmp.eq.s32.totalorder %s19, 1
      %p121 = scmp.ne.s32.totalorder %s116, %s118
      %p122 = scmp.eq.s32.totalorder %s19, 0
      %p123 = por %p121, %p122
      %p124 = scmp.ne.s32.totalorder %s116, %s118
      %p125 = scmp.eq.s32.totalorder %s24, 1
      %p126 = por %p124, %p125
      %p127 = scmp.ne.s32.totalorder %s118, %s119
      %p128 = scmp.eq.s32.totalorder %s24, 0
      %p129 = por %p127, %p128
      %p130 = scmp.ne.s32.totalorder %s118, %s119
      %p131 = scmp.eq.s32.totalorder %s25, 1
      %p132 = por %p130, %p131
      %p134 = scmp.ne.s32.totalorder %s119, %s133
      %p135 = scmp.eq.s32.totalorder %s25, 0
      %p136 = por %p134, %p135
      %s137 = ssub.s32 %s19, %s26
      %p138 = scmp.eq.s32.totalorder %s137, 0
      %s140 = sadd.s32 %s139, 1
      %s141 = scalar_select %p138, %s139, %s140
      %p144 = pneg %p138
      %p145 = scmp.eq.s32.totalorder %s19, 1
      %p146 = por %p144, %p145
      %p147 = scmp.ne.s32.totalorder %s139, %s142
      %p148 = scmp.eq.s32.totalorder %s19, 0
      %p149 = por %p147, %p148
      %p150 = scmp.ne.s32.totalorder %s139, %s142
      %p151 = scmp.eq.s32.totalorder %s24, 1
      %p152 = por %p150, %p151
      %p153 = scmp.ne.s32.totalorder %s142, %s143
      %p154 = scmp.eq.s32.totalorder %s24, 0
      %p155 = por %p153, %p154
      %p156 = scmp.ne.s32.totalorder %s142, %s143
      %p157 = scmp.eq.s32.totalorder %s25, 1
      %p158 = por %p156, %p157
      %p160 = scmp.ne.s32.totalorder %s143, %s159
      %p161 = scmp.eq.s32.totalorder %s25, 0
      %p162 = por %p160, %p161
      %p163 = scmp.le.s32.totalorder 1, %s19
      %p164 = scmp.lt.s32.totalorder %s19, 3
      %p165 = pnand %p163, %p164
      %p166 = pneg %p165
      // Predicated region
      $region9: #{tpu_custom_call.1} parent=5 // pred_check
        _
      $region10: #{tpu_custom_call.1} parent=5 // pred_check_branch
        %168 = sbr.rel (%p165) target = $region12
      $region11: #{tpu_custom_call.1} parent=5 // pred_region
        %s169 = ssub.s32 %s19, 1
        // Predicated region
        $region13: #{tpu_custom_call.1} parent=11 // pred_check
          %p170 = pneg %p66
        $region14: #{tpu_custom_call.1} parent=11 // pred_check_branch
          %172 = sbr.rel (%p170) target = $region16
        $region15: #{tpu_custom_call.1} parent=11 // pred_region
          %s174 = ssub.s32 512, 512
          %175 = vsyncadd [#allocation6], %s174
          %s176 = sshll.u32 [#allocation5], 4
          %s177 = int_to_ptr.vmem [resolvable:$true] %s176
          %182 = dma.hbm_to_vmem [thread:$0]  %s1, 512, %s177, [#allocation6], 128, 128, 8
        $region16: #{tpu_custom_call.1} parent=11 // pred_fallthru
          _
        // Predicated region
        $region17: #{tpu_custom_call.1} parent=11 // pred_check
          %p183 = pneg %p87
        $region18: #{tpu_custom_call.1} parent=11 // pred_check_branch
          %185 = sbr.rel (%p183) target = $region20
        $region19: #{tpu_custom_call.1} parent=11 // pred_region
          %s187 = ssub.s32 64, 64
          %188 = vsyncadd [#allocation6], %s187
          %s190 = sshll.u32 [#allocation7], 4
          %s191 = int_to_ptr.vmem [resolvable:$true] %s190
          %193 = dma.hbm_to_vmem [thread:$0]  %s2, 64, %s191, [#allocation6]
        $region20: #{tpu_custom_call.1} parent=11 // pred_fallthru
          _
        // Predicated region
        $region21: #{tpu_custom_call.1} parent=11 // pred_check
          %p194 = pneg %p108
        $region22: #{tpu_custom_call.1} parent=11 // pred_check_branch
          %196 = sbr.rel (%p194) target = $region24
        $region23: #{tpu_custom_call.1} parent=11 // pred_region
          %s198 = ssub.s32 512, 512
          %199 = vsyncadd [#allocation9], %s198
          %s200 = sshll.u32 [#allocation8], 4
          %s201 = int_to_ptr.vmem [resolvable:$true] %s200
          %206 = dma.hbm_to_vmem [thread:$0]  %s3, 512, %s201, [#allocation9], 128, 128, 8
        $region24: #{tpu_custom_call.1} parent=11 // pred_fallthru
          _
        // Predicated region
        $region25: #{tpu_custom_call.1} parent=11 // pred_check
          %p207 = pneg %p129
        $region26: #{tpu_custom_call.1} parent=11 // pred_check_branch
          %209 = sbr.rel (%p207) target = $region28
        $region27: #{tpu_custom_call.1} parent=11 // pred_region
          _
        $region28: #{tpu_custom_call.1} parent=11 // pred_fallthru
          _
      $region12: #{tpu_custom_call.1} parent=5 // pred_fallthru
        _
      %p210 = scmp.lt.s32.totalorder %s19, 2
      // Predicated region
      $region29: #{tpu_custom_call.1} parent=5 // pred_check
        %p211 = pneg %p210
      $region30: #{tpu_custom_call.1} parent=5 // pred_check_branch
        %213 = sbr.rel (%p211) target = $region32
      $region31: #{tpu_custom_call.1} parent=5 // pred_region
        // Predicated region
        $region33: #{tpu_custom_call.1} parent=31 // pred_check
          %p214 = pneg %p39
        $region34: #{tpu_custom_call.1} parent=31 // pred_check_branch
          %216 = sbr.rel (%p214) target = $region36
        $region35: #{tpu_custom_call.1} parent=31 // pred_region
          %s217 = sand.u32 %s29, 1
          %s218 = scalar_lea.sflag [#allocation3], %s217
          %s219 = sand.u32 %s29, 1
          %s220 = smul.addr %s219, 8
          %s221 = scalar_lea.vmem [#allocation2], %s220
          %s223 = ssub.s32 128, 128
          %224 = vsyncadd %s218, %s223
          %s225 = smul.addr %s19, 128
          %s226 = scalar_lea.hbm %s0, %s225
          %s228 = sshll.u32 %s221, 4
          %s229 = int_to_ptr.vmem [resolvable:$true] %s228
          %231 = dma.hbm_to_vmem [thread:$0]  %s226, 128, %s229, %s218
        $region36: #{tpu_custom_call.1} parent=31 // pred_fallthru
          _
      $region32: #{tpu_custom_call.1} parent=5 // pred_fallthru
        _
      %p232 = scmp.le.s32.totalorder 1, %s19
      %p233 = scmp.lt.s32.totalorder %s19, 3
      %p234 = pnand %p232, %p233
      %p235 = pneg %p234
      // Predicated region
      $region37: #{tpu_custom_call.1} parent=5 // pred_check
        _
      $region38: #{tpu_custom_call.1} parent=5 // pred_check_branch
        %237 = sbr.rel (%p234) target = $region40
      $region39: #{tpu_custom_call.1} parent=5 // pred_region
        %s238 = ssub.s32 %s19, 1
        %s239 = sand.u32 %s32, 1
        %s240 = scalar_lea.sflag [#allocation3], %s239
        %s241 = sand.u32 %s32, 1
        %s242 = smul.addr %s241, 8
        %s243 = scalar_lea.vmem [#allocation2], %s242
        // Predicated region
        $region41: #{tpu_custom_call.1} parent=39 // pred_check
          %p244 = pneg %p45
        $region42: #{tpu_custom_call.1} parent=39 // pred_check_branch
          %246 = sbr.rel (%p244) target = $region44
        $region43: #{tpu_custom_call.1} parent=39 // pred_region
          %247 = dma.done %s240, 128
        $region44: #{tpu_custom_call.1} parent=39 // pred_fallthru
          _
        // Predicated region
        $region45: #{tpu_custom_call.1} parent=39 // pred_check
          %p248 = pneg %p66
        $region46: #{tpu_custom_call.1} parent=39 // pred_check_branch
          %250 = sbr.rel (%p248) target = $region48
        $region47: #{tpu_custom_call.1} parent=39 // pred_region
          %251 = dma.done [#allocation6], 512
        $region48: #{tpu_custom_call.1} parent=39 // pred_fallthru
          _
        // Predicated region
        $region49: #{tpu_custom_call.1} parent=39 // pred_check
          %p252 = pneg %p87
        $region50: #{tpu_custom_call.1} parent=39 // pred_check_branch
          %254 = sbr.rel (%p252) target = $region52
        $region51: #{tpu_custom_call.1} parent=39 // pred_region
          %255 = dma.done [#allocation6], 64
        $region52: #{tpu_custom_call.1} parent=39 // pred_fallthru
          _
        // Predicated region
        $region53: #{tpu_custom_call.1} parent=39 // pred_check
          %p256 = pneg %p108
        $region54: #{tpu_custom_call.1} parent=39 // pred_check_branch
          %258 = sbr.rel (%p256) target = $region56
        $region55: #{tpu_custom_call.1} parent=39 // pred_region
          %259 = dma.done [#allocation9], 512
        $region56: #{tpu_custom_call.1} parent=39 // pred_fallthru
          _
        %s260 = sand.u32 %s32, 1
        %s261 = scalar_lea.sflag [#allocation3], %s260
        %s262 = sand.u32 %s32, 1
        %s263 = smul.addr %s262, 8
        %s264 = scalar_lea.vmem [#allocation2], %s263
        %p265 = pneg %p45
        %p266 = pneg %p42
        %p267 = pneg %p66
        %p268 = pneg %p63
        %p269 = pneg %p87
        %p270 = pneg %p84
        %p271 = pneg %p108
        %p272 = pneg %p105
        %p273 = pneg %p129
        %p274 = pneg %p126
        %p275 = pneg %p155
        %p276 = pneg %p152
        %s277 = sand.u32 %s142, 1
        %s278 = scalar_lea.sflag [#allocation4], %s277
        %s279 = sand.u32 %s142, 1
        %s280 = smul.addr %s279, 8
        %s281 = scalar_lea.vmem [#allocation10], %s280
        %v282 = vld [vmem:[%s243] sm:$0xff]
        %v283 = vld [vmem:[#allocation5] sm:$0xff]
        %v284 = vld [vmem:[#allocation5 + $0x8] sm:$0xff]
        %v285 = vld [vmem:[#allocation5 + $0x10] sm:$0xff]
        %v286 = vld [vmem:[#allocation5 + $0x18] sm:$0xff]
        %v287 = vld [vmem:[#allocation7] sm:$0x1]
        %v288 = vlaneseq
        %v289 = vshrl.u32 %v288, 7
        %v290 = vsub.s32 0, %v289
        %v291 = vrot.slane %v287, %v290
        %vm292 = vcmask 261120
        %v294 = vsel %vm292, %v282, 0
        %296 = vmatprep.subr.mxu0 0.0
        %297 = vmatpush1.msra.mxu0 0.0
        %298 = vmatprep.subr.mxu0 0.0
        %299 = vmatpush1.msra.mxu0 0.0
        %300 = vmatprep.subr.mxu0 0.0
        %301 = vmatpush1.msra.mxu0 0.0
        %302 = vmatprep.subr.mxu0 0.0
        %303 = vmatpush1.msra.mxu0 0.0
        %304 = vmatprep.subr.mxu0 0.0
        %305 = vmatpush1.msra.mxu0 0.0
        %306 = vmatprep.subr.mxu0 0.0
        %307 = vmatpush1.msra.mxu0 0.0
        %308 = vmatprep.subr.mxu0 0.0
        %309 = vmatpush1.msra.mxu0 0.0
        %310 = vmatprep.subr.mxu0 0.0
        %311 = vmatpush1.msra.mxu0 0.0
        %312 = vmatprep.subr.mxu0 0.0
        %313 = vmatpush1.msra.mxu0 0.0
        %314 = vmatprep.subr.mxu0 0.0
        %315 = vmatpush1.msra.mxu0 0.0
        %316 = vmatprep.subr.mxu0 0.0
        %317 = vmatpush1.msra.mxu0 0.0
        %318 = vmatprep.subr.mxu0 0.0
        %319 = vmatpush1.msra.mxu0 0.0
        %320 = vmatprep.subr.mxu0 0.0
        %321 = vmatpush1.msra.mxu0 %v286
        %322 = vmatprep.subr.mxu0 0.0
        %323 = vmatpush1.msra.mxu0 %v285
        %324 = vmatprep.subr.mxu0 0.0
        %325 = vmatpush1.msra.mxu0 %v284
        %326 = vmatprep.subr.mxu0 0.0
        %327 = vmatpush1.msra.mxu0 %v283
        %328 = vmatprep.subr.mxu0 0.0
        %329 = vmatpush2.msra.mxu0 0.0
        %330 = vmatprep.subr.mxu0 0.0
        %331 = vmatpush2.msra.mxu0 0.0
        %332 = vmatprep.subr.mxu0 0.0
        %333 = vmatpush2.msra.mxu0 0.0
        %334 = vmatprep.subr.mxu0 0.0
        %335 = vmatpush2.msra.mxu0 0.0
        %336 = vmatprep.subr.mxu0 0.0
        %337 = vmatpush2.msra.mxu0 0.0
        %338 = vmatprep.subr.mxu0 0.0
        %339 = vmatpush2.msra.mxu0 0.0
        %340 = vmatprep.subr.mxu0 0.0
        %341 = vmatpush2.msra.mxu0 0.0
        %342 = vmatprep.subr.mxu0 0.0
        %343 = vmatpush2.msra.mxu0 0.0
        %344 = vmatprep.subr.mxu0 0.0
        %345 = vmatpush2.msra.mxu0 0.0
        %346 = vmatprep.subr.mxu0 0.0
        %347 = vmatpush2.msra.mxu0 0.0
        %348 = vmatprep.subr.mxu0 0.0
        %349 = vmatpush2.msra.mxu0 0.0
        %350 = vmatprep.subr.mxu0 0.0
        %351 = vmatpush2.msra.mxu0 0.0
        %352 = vmatprep.subr.mxu0 0.0
        %353 = vmatpush2.msra.mxu0 0.0
        %354 = vmatprep.subr.mxu0 0.0
        %355 = vmatpush2.msra.mxu0 0.0
        %356 = vmatprep.subr.mxu0 0.0
        %357 = vmatpush2.msra.mxu0 0.0
        %358 = vmatprep.subr.mxu0 0.0
        %359 = vmatpush2.msra.mxu0 0.0
        %360 = vmatprep.mubr.f32.mxu0 0.0
        %361 = vmatmul.mubr.f32.gmra.mxu0 %v294
        %v362 = vpop.f32.mrf.mxu0
        %v363 = vadd.f32 %v291, %v362
        %v364 = vpop.f32.mrf.mxu0
        %365 = vdwg.mxu0
        %v366 = vsel %vm292, %v363, 0.0
        %367 = vadd.xlane.f32.xlu0 %v366
        %v368 = vpop.xlane.xlu0 %367
        %v369 = vrcp.pop 32.0
        %v370 = vmul.f32 %v368, %v369
        %v371 = vmul.f32 %v363, %v363
        %v372 = vsel %vm292, %v371, 0.0
        %373 = vadd.xlane.f32.xlu0 %v372
        %v374 = vpop.xlane.xlu0 %373
        %v375 = vmul.f32 %v374, %v369
        %v376 = vmul.f32 %v370, %v370
        %v377 = vsub.f32 %v375, %v376
        %v378 = vmax.f32 %v377, 0.0
        %v379 = vld [vmem:[#allocation7 + $0x1] sm:$0x1]
        %v380 = vadd.f32 %v378, 1e-12
        %v381 = vrsqrt.pop %v380
        %v382 = vlaneseq
        %v383 = vshrl.u32 %v382, 7
        %v384 = vsub.s32 0, %v383
        %v385 = vrot.slane %v379, %v384
        %v386 = vmul.f32 %v385, %v381
        %v387 = vmul.f32 %v363, %v386
        %v388 = vld [vmem:[#allocation7 + $0x2] sm:$0x1]
        %v389 = vmul.f32 %v370, %v386
        %v390 = vlaneseq
        %v391 = vshrl.u32 %v390, 7
        %v392 = vsub.s32 0, %v391
        %v393 = vrot.slane %v388, %v392
        %v394 = vsub.f32 %v393, %v389
        %v395 = vadd.f32 %v387, %v394
        %v396 = vmul.f32 %v395, 0.5
        %v397 = vmul.f32 %v395, 0.70710677
        %v398 = verf.f32.pop %v397
        %v399 = vadd.f32 %v398, 1.0
        %v400 = vmul.f32 %v396, %v399
        %v401 = vld [vmem:[#allocation8] sm:$0xff]
        %v402 = vld [vmem:[#allocation8 + $0x8] sm:$0xff]
        %v403 = vld [vmem:[#allocation8 + $0x10] sm:$0xff]
        %v404 = vld [vmem:[#allocation8 + $0x18] sm:$0xff]
        %v405 = vld [vmem:[%s4] sm:$0x1]
        %v407 = vlaneseq
        %v408 = vshrl.u32 %v407, 7
        %v409 = vsub.s32 0, %v408
        %v410 = vrot.slane %v405, %v409
        %v413 = vsel %vm292, %v400, 0
        %415 = vmatprep.subr.mxu0 0.0
        %416 = vmatpush1.msra.mxu0 0.0
        %417 = vmatprep.subr.mxu0 0.0
        %418 = vmatpush1.msra.mxu0 0.0
        %419 = vmatprep.subr.mxu0 0.0
        %420 = vmatpush1.msra.mxu0 0.0
        %421 = vmatprep.subr.mxu0 0.0
        %422 = vmatpush1.msra.mxu0 0.0
        %423 = vmatprep.subr.mxu0 0.0
        %424 = vmatpush1.msra.mxu0 0.0
        %425 = vmatprep.subr.mxu0 0.0
        %426 = vmatpush1.msra.mxu0 0.0
        %427 = vmatprep.subr.mxu0 0.0
        %428 = vmatpush1.msra.mxu0 0.0
        %429 = vmatprep.subr.mxu0 0.0
        %430 = vmatpush1.msra.mxu0 0.0
        %431 = vmatprep.subr.mxu0 0.0
        %432 = vmatpush1.msra.mxu0 0.0
        %433 = vmatprep.subr.mxu0 0.0
        %434 = vmatpush1.msra.mxu0 0.0
        %435 = vmatprep.subr.mxu0 0.0
        %436 = vmatpush1.msra.mxu0 0.0
        %437 = vmatprep.subr.mxu0 0.0
        %438 = vmatpush1.msra.mxu0 0.0
        %439 = vmatprep.subr.mxu0 0.0
        %440 = vmatpush1.msra.mxu0 %v404
        %441 = vmatprep.subr.mxu0 0.0
        %442 = vmatpush1.msra.mxu0 %v403
        %443 = vmatprep.subr.mxu0 0.0
        %444 = vmatpush1.msra.mxu0 %v402
        %445 = vmatprep.subr.mxu0 0.0
        %446 = vmatpush1.msra.mxu0 %v401
        %447 = vmatprep.subr.mxu0 0.0
        %448 = vmatpush2.msra.mxu0 0.0
        %449 = vmatprep.subr.mxu0 0.0
        %450 = vmatpush2.msra.mxu0 0.0
        %451 = vmatprep.subr.mxu0 0.0
        %452 = vmatpush2.msra.mxu0 0.0
        %453 = vmatprep.subr.mxu0 0.0
        %454 = vmatpush2.msra.mxu0 0.0
        %455 = vmatprep.subr.mxu0 0.0
        %456 = vmatpush2.msra.mxu0 0.0
        %457 = vmatprep.subr.mxu0 0.0
        %458 = vmatpush2.msra.mxu0 0.0
        %459 = vmatprep.subr.mxu0 0.0
        %460 = vmatpush2.msra.mxu0 0.0
        %461 = vmatprep.subr.mxu0 0.0
        %462 = vmatpush2.msra.mxu0 0.0
        %463 = vmatprep.subr.mxu0 0.0
        %464 = vmatpush2.msra.mxu0 0.0
        %465 = vmatprep.subr.mxu0 0.0
        %466 = vmatpush2.msra.mxu0 0.0
        %467 = vmatprep.subr.mxu0 0.0
        %468 = vmatpush2.msra.mxu0 0.0
        %469 = vmatprep.subr.mxu0 0.0
        %470 = vmatpush2.msra.mxu0 0.0
        %471 = vmatprep.subr.mxu0 0.0
        %472 = vmatpush2.msra.mxu0 0.0
        %473 = vmatprep.subr.mxu0 0.0
        %474 = vmatpush2.msra.mxu0 0.0
        %475 = vmatprep.subr.mxu0 0.0
        %476 = vmatpush2.msra.mxu0 0.0
        %477 = vmatprep.subr.mxu0 0.0
        %478 = vmatpush2.msra.mxu0 0.0
        %479 = vmatprep.mubr.f32.mxu0 0.0
        %480 = vmatmul.mubr.f32.gmra.mxu0 %v413
        %v481 = vpop.f32.mrf.mxu0
        %v482 = vadd.f32 %v410, %v481
        %v483 = vpop.f32.mrf.mxu0
        %484 = vdwg.mxu0
        %485 = vst.msk [vmem:[%s281] sm:$0xff] %vm292, %v482
        %s486 = sand.u32 %s142, 1
        %s487 = scalar_lea.sflag [#allocation4], %s486
        %s488 = sand.u32 %s142, 1
        %s489 = smul.addr %s488, 8
        %s490 = scalar_lea.vmem [#allocation10], %s489
        // Predicated region
        $region57: #{tpu_custom_call.1} parent=39 // pred_check
          %p491 = pneg %p152
        $region58: #{tpu_custom_call.1} parent=39 // pred_check_branch
          %493 = sbr.rel (%p491) target = $region60
        $region59: #{tpu_custom_call.1} parent=39 // pred_region
          %s495 = ssub.s32 128, 128
          %496 = vsyncadd %s487, %s495
          %s497 = smul.addr %s24, 128
          %s498 = scalar_lea.hbm %s5, %s497
          %s500 = sshll.u32 %s490, 4
          %s501 = int_to_ptr.vmem [resolvable:$true] %s500
          %503 = dma.vmem_to_hbm [thread:$0]  %s501, 128, %s498, %s487
        $region60: #{tpu_custom_call.1} parent=39 // pred_fallthru
          _
      $region40: #{tpu_custom_call.1} parent=5 // pred_fallthru
        _
      %p504 = scmp.le.s32.totalorder 2, %s19
      // Predicated region
      $region61: #{tpu_custom_call.1} parent=5 // pred_check
        %p505 = pneg %p504
      $region62: #{tpu_custom_call.1} parent=5 // pred_check_branch
        %507 = sbr.rel (%p505) target = $region64
      $region63: #{tpu_custom_call.1} parent=5 // pred_region
        %s508 = ssub.s32 %s19, 2
        // Predicated region
        $region65: #{tpu_custom_call.1} parent=63 // pred_check
          %p509 = pneg %p158
        $region66: #{tpu_custom_call.1} parent=63 // pred_check_branch
          %511 = sbr.rel (%p509) target = $region68
        $region67: #{tpu_custom_call.1} parent=63 // pred_region
          %s512 = sand.u32 %s143, 1
          %s513 = scalar_lea.sflag [#allocation4], %s512
          %s514 = sand.u32 %s143, 1
          %s515 = smul.addr %s514, 8
          %s516 = scalar_lea.vmem [#allocation10], %s515
          %517 = dma.done %s513, 128
        $region68: #{tpu_custom_call.1} parent=63 // pred_fallthru
          _
      $region64: #{tpu_custom_call.1} parent=5 // pred_fallthru
        _
    $region6: #{tpu_custom_call.1} parent=1 // loop_footer
      %s23 = sadd.s32 1, %s19
    $region7: #{tpu_custom_call.1} parent=1 // loop_footer_branch
      %18 = sbr.rel target = $region3
    $region8: #{tpu_custom_call.1} parent=1 // loop_exit
      _
    %518 = vsyncpa [#allocation3], 1
    %s519 = scalar_lea.sflag [#allocation3], 1
    %520 = vsyncpa %s519, 1
    %521 = vsyncpa [#allocation6], 1
    %522 = vsyncpa [#allocation9], 1
    %523 = vsyncpa [#allocation4], 1
    %s524 = scalar_lea.sflag [#allocation4], 1
    %525 = vsyncpa %s524, 1

</llo_original>
